<compile_context>
chip_gen: v7x
topology: tpu7x:2x2x1
jax: 0.10.0
libtpu: 0.0.40
codegen_flags: <defaults>
</compile_context>

<pallas_src>
import functools

import jax
import jax.numpy as jnp
from jax.experimental import pallas as pl
from jax.experimental.pallas import tpu as pltpu

LANE = 128      # TPU lane width (last dim)
SUBLANE = 8     # TPU sublane width (second-to-last dim, f32)
MAX_TB = 512    # max batch-tile rows


# -----------------------------------------------------------------------------
# Pallas kernel: fused 3-layer MLP forward on one batch tile.
# -----------------------------------------------------------------------------
def mlp_kernel(x_ref, w1_ref, b1_ref, w2_ref, b2_ref, w3_ref, b3_ref, o_ref):
    x = x_ref[...]                                                   # (TB, D)
    h1 = jnp.dot(x, w1_ref[...], preferred_element_type=jnp.float32)
    h1 = jnp.maximum(h1 + b1_ref[...], 0.0)                          # f32 ReLU
    h2 = jnp.dot(h1.astype(w2_ref.dtype), w2_ref[...],
                 preferred_element_type=jnp.float32)
    h2 = jnp.maximum(h2 + b2_ref[...], 0.0)                          # f32 ReLU
    y = jnp.dot(h2.astype(w3_ref.dtype), w3_ref[...],
                preferred_element_type=jnp.float32)
    y = y + b3_ref[...]                                              # (TB, Op)
    # Narrow store: only the real output columns are written (masked vst).
    no = o_ref.shape[-1]
    o_ref[...] = y[:, :no].astype(o_ref.dtype)


# -----------------------------------------------------------------------------
# Helpers
# -----------------------------------------------------------------------------
def _round_up(n, m):
    return ((n + m - 1) // m) * m


def _cdiv(a, b):
    return (a + b - 1) // b


def _pad2d(a, rows, cols):
    return jnp.pad(a, ((0, rows - a.shape[0]), (0, cols - a.shape[1])))


def _choose_tb(batch):
    """Batch tile that splits the (8-rounded) batch evenly into <=512-row
    tiles, so batch over-padding is at most a handful of rows.

    Note: on v7x (2 TensorCores) a forced >=2-step split for small batches
    would let the "parallel" axis shard across cores; on 1-TC v5e/v6e that
    split only adds per-step overhead, so we keep the simple even split here.
    """
    b8 = _round_up(max(batch, 1), SUBLANE)
    n_steps = _cdiv(b8, MAX_TB)
    return min(MAX_TB, _round_up(_cdiv(b8, n_steps), SUBLANE))


# -----------------------------------------------------------------------------
# One-time parameter preparation (outside the per-call path):
#   * hidden/output dims padded to lane multiples, feature dim left as-is
#   * weights cast to compute_dtype (bf16 by default: halves DMA, native MXU)
#   * biases stay f32 (added to the f32 accumulator)
# -----------------------------------------------------------------------------
def prepare_params(params, compute_dtype=jnp.bfloat16):
    w1, b1, w2, b2, w3, b3 = params     # w*: (in, out), b*: (out,)
    D, H1 = w1.shape
    H2 = w2.shape[1]
    O = w3.shape[1]

    H1p = _round_up(H1, LANE)
    H2p = _round_up(H2, LANE)
    Op = _round_up(O, LANE)

    w1_p = _pad2d(w1, D, H1p).astype(compute_dtype)     # feature dim unpadded
    w2_p = _pad2d(w2, H1p, H2p).astype(compute_dtype)
    w3_p = _pad2d(w3, H2p, Op).astype(compute_dtype)
    b1_p = _pad2d(b1.astype(jnp.float32)[None, :], 1, H1p)
    b2_p = _pad2d(b2.astype(jnp.float32)[None, :], 1, H2p)
    b3_p = _pad2d(b3.astype(jnp.float32)[None, :], 1, Op)
    return (w1_p, b1_p, w2_p, b2_p, w3_p, b3_p)


# -----------------------------------------------------------------------------
# Forward: row-pads x (tiny), calls pallas_call with a batch-tiled grid.
# -----------------------------------------------------------------------------
@functools.partial(jax.jit, static_argnames=("out_features",))
def feed_forward_regressor(x, padded_params, out_features=1):
    w1_p, b1_p, w2_p, b2_p, w3_p, b3_p = padded_params
    B, D = x.shape
    assert D == w1_p.shape[0], (D, w1_p.shape)
    H1p = w1_p.shape[1]
    H2p = w2_p.shape[1]
    Op = w3_p.shape[1]
    # NOTE: out_features larger than the true output width would silently
    # return zero-padded columns; it must not exceed the padded width.
    assert out_features <= Op, (out_features, Op)

    TB = _choose_tb(B)
    Bp = TB * _cdiv(B, TB)
    grid = (Bp // TB,)

    x_p = x.astype(w1_p.dtype)
    if Bp != B:
        x_p = jnp.pad(x_p, ((0, Bp - B), (0, 0)))       # few rows at most

    cdt = jnp.dtype(w1_p.dtype).itemsize
    weight_bytes = (w1_p.size + w2_p.size + w3_p.size) * cdt
    bias_bytes = (b1_p.size + b2_p.size + b3_p.size) * 4

    # Advisory cost hint for XLA's scheduler (dims actually processed).
    cost = pl.CostEstimate(
        flops=2 * Bp * (D * H1p + H1p * H2p + H2p * Op),
        transcendentals=0,
        bytes_accessed=Bp * D * cdt + weight_bytes + bias_bytes
                       + Bp * out_features * 4)

    # Explicit scoped-VMEM limit so larger hidden sizes don't hit the default.
    vmem_need = (2 * TB * D * cdt                     # x tile, double-buffered
                 + 2 * TB * out_features * 4          # out tile
                 + 2 * (weight_bytes + bias_bytes)    # resident weights/biases
                 + TB * (H1p + H2p + Op) * 4)         # live f32 intermediates
    vmem_limit = min(64 << 20, max(2 * vmem_need + (4 << 20), 32 << 20))

    out_p = pl.pallas_call(
        mlp_kernel,
        out_shape=jax.ShapeDtypeStruct((Bp, out_features), jnp.float32),
        grid_spec=pltpu.PrefetchScalarGridSpec(
            num_scalar_prefetch=0,
            grid=grid,
            in_specs=[
                pl.BlockSpec((TB, D), lambda i: (i, 0)),     # x batch tile
                pl.BlockSpec((D, H1p), lambda i: (0, 0)),    # w1 (resident)
                pl.BlockSpec((1, H1p), lambda i: (0, 0)),    # b1
                pl.BlockSpec((H1p, H2p), lambda i: (0, 0)),  # w2 (resident)
                pl.BlockSpec((1, H2p), lambda i: (0, 0)),    # b2
                pl.BlockSpec((H2p, Op), lambda i: (0, 0)),   # w3 (resident)
                pl.BlockSpec((1, Op), lambda i: (0, 0)),     # b3
            ],
            out_specs=pl.BlockSpec((TB, out_features), lambda i: (i, 0)),
        ),
        compiler_params=pltpu.CompilerParams(
            dimension_semantics=("parallel",),
            vmem_limit_bytes=int(vmem_limit)),
        cost_estimate=cost,
    )(x_p, w1_p, b1_p, w2_p, b2_p, w3_p, b3_p)

    return out_p[:B] if Bp != B else out_p


# -----------------------------------------------------------------------------
# Deterministic parameter init (mimics nn.Linear's U(-1/sqrt(fan_in), +...))
# -----------------------------------------------------------------------------
def init_params(key, input_size, hidden_size1, hidden_size2):
    def linear(key, fan_in, fan_out):
        kw, kb = jax.random.split(key)
        bound = 1.0 / jnp.sqrt(jnp.float32(fan_in))
        w = jax.random.uniform(kw, (fan_in, fan_out), jnp.float32, -bound, bound)
        b = jax.random.uniform(kb, (fan_out,), jnp.float32, -bound, bound)
        return w, b

    k1, k2, k3 = jax.random.split(key, 3)
    w1, b1 = linear(k1, input_size, hidden_size1)
    w2, b2 = linear(k2, hidden_size1, hidden_size2)
    w3, b3 = linear(k3, hidden_size2, 1)
    return (w1, b1, w2, b2, w3, b3)


def reference_forward(x, params):
    w1, b1, w2, b2, w3, b3 = params
    h1 = jnp.maximum(x @ w1 + b1, 0.0)
    h2 = jnp.maximum(h1 @ w2 + b2, 0.0)
    return h2 @ w3 + b3


if __name__ == "__main__":
    input_size = 16
    hidden_size1 = 2
    hidden_size2 = 2
    batch = 8

    key = jax.random.PRNGKey(0)
    kx, kp = jax.random.split(key)
    x = jax.random.normal(kx, (batch, input_size), jnp.float32)
    params = init_params(kp, input_size, hidden_size1, hidden_size2)

    # f32 operands: exactness check against the pure-JAX reference.
    params_f32 = prepare_params(params, compute_dtype=jnp.float32)
    out = jax.block_until_ready(
        feed_forward_regressor(x, params_f32, out_features=1))
    ref = reference_forward(x, params)
    assert out.shape == (batch, 1), out.shape
    assert jnp.allclose(out, ref, atol=1e-5, rtol=1e-5), (out, ref)

    # Default bf16 operands (f32 accumulation): loose tolerance.
    params_bf16 = prepare_params(params)    # compute_dtype=bfloat16 default
    out_bf = jax.block_until_ready(
        feed_forward_regressor(x, params_bf16, out_features=1))
    assert out_bf.shape == (batch, 1), out_bf.shape
    assert jnp.allclose(out_bf, ref, atol=1e-1, rtol=1e-1), (out_bf, ref)

    # Multi-tile path (even batch split, grid > 1, few-row padding).
    big_batch = 1000
    xb = jax.random.normal(jax.random.PRNGKey(1), (big_batch, input_size),
                           jnp.float32)
    out_b = jax.block_until_ready(
        feed_forward_regressor(xb, params_f32, out_features=1))
    ref_b = reference_forward(xb, params)
    assert out_b.shape == (big_batch, 1), out_b.shape
    assert jnp.allclose(out_b, ref_b, atol=1e-4, rtol=1e-4)

    print("KERNEL_OK")
</pallas_src>

<mosaic_0001>
module attributes {stable_mosaic.version = 11 : i64} {
  func.func @mlp_kernel(%arg0: i32, %arg1: memref<8x16xf32, #tpu.memory_space<vmem>>, %arg2: memref<16x128xf32, #tpu.memory_space<vmem>>, %arg3: memref<1x128xf32, #tpu.memory_space<vmem>>, %arg4: memref<128x128xf32, #tpu.memory_space<vmem>>, %arg5: memref<1x128xf32, #tpu.memory_space<vmem>>, %arg6: memref<128x128xf32, #tpu.memory_space<vmem>>, %arg7: memref<1x128xf32, #tpu.memory_space<vmem>>, %arg8: memref<8x1xf32, #tpu.memory_space<vmem>>) attributes {dimension_semantics = [#tpu.dimension_semantics<parallel>], iteration_bounds = array<i64: 1>, scalar_prefetch = 0 : i64, scratch_operands = 0 : i64, tpu.core_type = #tpu.core_type<tc>, window_params = [{transform_indices = @transform_0, window_bounds = array<i64: 8, 16>}, {pipeline_mode = #tpu.pipeline_mode<synchronous>, transform_indices = @transform_1, window_bounds = array<i64: 16, 128>}, {pipeline_mode = #tpu.pipeline_mode<synchronous>, transform_indices = @transform_2, window_bounds = array<i64: 1, 128>}, {pipeline_mode = #tpu.pipeline_mode<synchronous>, transform_indices = @transform_3, window_bounds = array<i64: 128, 128>}, {pipeline_mode = #tpu.pipeline_mode<synchronous>, transform_indices = @transform_4, window_bounds = array<i64: 1, 128>}, {pipeline_mode = #tpu.pipeline_mode<synchronous>, transform_indices = @transform_5, window_bounds = array<i64: 128, 128>}, {pipeline_mode = #tpu.pipeline_mode<synchronous>, transform_indices = @transform_6, window_bounds = array<i64: 1, 128>}, {transform_indices = @transform_7, window_bounds = array<i64: 8, 1>}]} {
    %c0 = arith.constant 0 : index
    %c0_0 = arith.constant 0 : index
    %0 = vector.load %arg1[%c0, %c0_0] : memref<8x16xf32, #tpu.memory_space<vmem>>, vector<8x16xf32>
    %c0_1 = arith.constant 0 : index
    %c0_2 = arith.constant 0 : index
    %1 = vector.load %arg2[%c0_1, %c0_2] : memref<16x128xf32, #tpu.memory_space<vmem>>, vector<16x128xf32>
    %cst = arith.constant dense<0.000000e+00> : vector<8x128xf32>
    %2 = tpu.matmul %0, %1, %cst {dimension_numbers = #tpu.dot_dimension_numbers<[1], [0], [0], [1], [0, 0, 1, 1], [], []>} : vector<8x16xf32>, vector<16x128xf32>, vector<8x128xf32> -> vector<8x128xf32>
    %c0_3 = arith.constant 0 : index
    %c0_4 = arith.constant 0 : index
    %3 = vector.load %arg3[%c0_3, %c0_4] : memref<1x128xf32, #tpu.memory_space<vmem>>, vector<1x128xf32>
    %4 = vector.broadcast %3 : vector<1x128xf32> to vector<8x128xf32>
    %5 = arith.addf %2, %4 : vector<8x128xf32>
    %cst_5 = arith.constant 0.000000e+00 : f32
    %6 = vector.broadcast %cst_5 : f32 to vector<8x128xf32>
    %7 = arith.maximumf %5, %6 : vector<8x128xf32>
    %c0_6 = arith.constant 0 : index
    %c0_7 = arith.constant 0 : index
    %8 = vector.load %arg4[%c0_6, %c0_7] : memref<128x128xf32, #tpu.memory_space<vmem>>, vector<128x128xf32>
    %cst_8 = arith.constant dense<0.000000e+00> : vector<8x128xf32>
    %9 = tpu.matmul %7, %8, %cst_8 {dimension_numbers = #tpu.dot_dimension_numbers<[1], [0], [0], [1], [0, 0, 1, 1], [], []>} : vector<8x128xf32>, vector<128x128xf32>, vector<8x128xf32> -> vector<8x128xf32>
    %c0_9 = arith.constant 0 : index
    %c0_10 = arith.constant 0 : index
    %10 = vector.load %arg5[%c0_9, %c0_10] : memref<1x128xf32, #tpu.memory_space<vmem>>, vector<1x128xf32>
    %11 = vector.broadcast %10 : vector<1x128xf32> to vector<8x128xf32>
    %12 = arith.addf %9, %11 : vector<8x128xf32>
    %cst_11 = arith.constant 0.000000e+00 : f32
    %13 = vector.broadcast %cst_11 : f32 to vector<8x128xf32>
    %14 = arith.maximumf %12, %13 : vector<8x128xf32>
    %c0_12 = arith.constant 0 : index
    %c0_13 = arith.constant 0 : index
    %15 = vector.load %arg6[%c0_12, %c0_13] : memref<128x128xf32, #tpu.memory_space<vmem>>, vector<128x128xf32>
    %cst_14 = arith.constant dense<0.000000e+00> : vector<8x128xf32>
    %16 = tpu.matmul %14, %15, %cst_14 {dimension_numbers = #tpu.dot_dimension_numbers<[1], [0], [0], [1], [0, 0, 1, 1], [], []>} : vector<8x128xf32>, vector<128x128xf32>, vector<8x128xf32> -> vector<8x128xf32>
    %c0_15 = arith.constant 0 : index
    %c0_16 = arith.constant 0 : index
    %17 = vector.load %arg7[%c0_15, %c0_16] : memref<1x128xf32, #tpu.memory_space<vmem>>, vector<1x128xf32>
    %18 = vector.broadcast %17 : vector<1x128xf32> to vector<8x128xf32>
    %19 = arith.addf %16, %18 : vector<8x128xf32>
    %20 = vector.extract_strided_slice %19 {offsets = [0, 0], sizes = [8, 1], strides = [1, 1]} : vector<8x128xf32> to vector<8x1xf32>
    %c0_17 = arith.constant 0 : index
    %c0_18 = arith.constant 0 : index
    %21 = vector.load %arg8[%c0_17, %c0_18] : memref<8x1xf32, #tpu.memory_space<vmem>>, vector<8x1xf32>
    tpu.vector_store %arg8[%c0_17, %c0_18], %20 {strides = array<i32>} : memref<8x1xf32, #tpu.memory_space<vmem>>, vector<8x1xf32>,
    return
  }
  func.func @transform_0(%arg0: i32) -> (i32, i32) {
    %c0_i32 = arith.constant 0 : i32
    %c0_i32_0 = arith.constant 0 : i32
    return %arg0, %c0_i32 : i32, i32
  }
  func.func @transform_1(%arg0: i32) -> (i32, i32) {
    %c0_i32 = arith.constant 0 : i32
    %c0_i32_0 = arith.constant 0 : i32
    %c0_i32_1 = arith.constant 0 : i32
    return %c0_i32, %c0_i32_0 : i32, i32
  }
  func.func @transform_2(%arg0: i32) -> (i32, i32) {
    %c0_i32 = arith.constant 0 : i32
    %c0_i32_0 = arith.constant 0 : i32
    %c0_i32_1 = arith.constant 0 : i32
    return %c0_i32, %c0_i32_0 : i32, i32
  }
  func.func @transform_3(%arg0: i32) -> (i32, i32) {
    %c0_i32 = arith.constant 0 : i32
    %c0_i32_0 = arith.constant 0 : i32
    %c0_i32_1 = arith.constant 0 : i32
    return %c0_i32, %c0_i32_0 : i32, i32
  }
  func.func @transform_4(%arg0: i32) -> (i32, i32) {
    %c0_i32 = arith.constant 0 : i32
    %c0_i32_0 = arith.constant 0 : i32
    %c0_i32_1 = arith.constant 0 : i32
    return %c0_i32, %c0_i32_0 : i32, i32
  }
  func.func @transform_5(%arg0: i32) -> (i32, i32) {
    %c0_i32 = arith.constant 0 : i32
    %c0_i32_0 = arith.constant 0 : i32
    %c0_i32_1 = arith.constant 0 : i32
    return %c0_i32, %c0_i32_0 : i32, i32
  }
  func.func @transform_6(%arg0: i32) -> (i32, i32) {
    %c0_i32 = arith.constant 0 : i32
    %c0_i32_0 = arith.constant 0 : i32
    %c0_i32_1 = arith.constant 0 : i32
    return %c0_i32, %c0_i32_0 : i32, i32
  }
  func.func @transform_7(%arg0: i32) -> (i32, i32) {
    %c0_i32 = arith.constant 0 : i32
    %c0_i32_0 = arith.constant 0 : i32
    return %arg0, %c0_i32 : i32, i32
  }
}

</mosaic_0001>

<llo_original>
// kernel: feed_forward_regressor.1
$region0: #{feed_forward_regressor.1}
  #allocation0 [shape = 'u32[]', space=smem, size = 0x4, offset = 0x4, fixed_abs, tag = 'smem constant byte address 0x4 - core index']
  #allocation1 [shape = 'u32[144,128]{1,0:T(1,128)}', space=vmem, size = 0x12000, scoped, tag = 'internal scratch']
  %s0 = inlined_call_operand.hbm [shape: f32[8,16], index: 0, kind: input, shape index: {}]
  %s1 = inlined_call_operand.hbm [shape: f32[16,128], index: 1, kind: input, shape index: {}]
  %s2 = inlined_call_operand.vmem [shape: f32[1,128], index: 2, kind: input, shape index: {}]
  %s3 = inlined_call_operand.hbm [shape: f32[128,128], index: 3, kind: input, shape index: {}]
  %s4 = inlined_call_operand.vmem [shape: f32[1,128], index: 4, kind: input, shape index: {}]
  %s5 = inlined_call_operand.hbm [shape: f32[128,128], index: 5, kind: input, shape index: {}]
  %s6 = inlined_call_operand.vmem [shape: f32[1,128], index: 6, kind: input, shape index: {}]
  %s7 = inlined_call_operand.vmem [shape: f32[8,1], index: 7, kind: output, shape index: {}]
  %s8 = sld [smem:[#allocation0]]
  $region54: #{feed_forward_regressor.1} parent=0
    _
  %s10 = ssub.s32 1, %s8
  %s11 = scalar_select 0, %s10, %s8
  $region1: #{feed_forward_regressor.1} parent=0
    #allocation2 [shape = 'u8[4096]{0}', space=vmem, size = 0x1000, scoped, tag = 'input window, operand 0, single buffered']
    #allocation3 [shape = 's32[1]{0}', space=sflag, size = 0x4, scoped, tag = 'scoped memory for feed_forward_regressor.1']
    #allocation4 [shape = 'u8[8192]{0}', space=vmem, size = 0x2000, scoped, tag = 'input window, operand 1, single buffered']
    #allocation5 [shape = 's32[1]{0}', space=sflag, size = 0x4, scoped, tag = 'scoped memory for feed_forward_regressor.1']
    #allocation6 [shape = 'u8[65536]{0}', space=vmem, size = 0x10000, scoped, tag = 'input window, operand 3, single buffered']
    #allocation7 [shape = 'u8[65536]{0}', space=vmem, size = 0x10000, scoped, tag = 'input window, operand 5, single buffered']
    #allocation8 [shape = 's32[1]{0}', space=sflag, size = 0x4, scoped, tag = 'scoped memory for feed_forward_regressor.1']
    %12 = vsyncpa [#allocation3], 0
    %13 = vsyncpa [#allocation5], 0
    %14 = vsyncpa [#allocation8], 0
    // Predicated region
    $region2: #{feed_forward_regressor.1} parent=1 // pred_check
      _
    $region3: #{feed_forward_regressor.1} parent=1 // pred_check_branch
      %16 = sbr.rel (0) target = $region5
    $region4: #{feed_forward_regressor.1} parent=1 // pred_region
      %s18 = ssub.s32 128, 128
      %19 = vsyncadd [#allocation3], %s18
      %s21 = sshll.u32 [#allocation2], 4
      %s22 = int_to_ptr.vmem [resolvable:$true] %s21
      %24 = dma.hbm_to_vmem [thread:$0]  %s0, 128, %s22, [#allocation3]
    $region5: #{feed_forward_regressor.1} parent=1 // pred_fallthru
      _
    // Predicated region
    $region6: #{feed_forward_regressor.1} parent=1 // pred_check
      _
    $region7: #{feed_forward_regressor.1} parent=1 // pred_check_branch
      %26 = sbr.rel (0) target = $region9
    $region8: #{feed_forward_regressor.1} parent=1 // pred_region
      %s28 = ssub.s32 256, 256
      %29 = vsyncadd [#allocation5], %s28
      %s30 = sshll.u32 [#allocation4], 4
      %s31 = int_to_ptr.vmem [resolvable:$true] %s30
      %36 = dma.hbm_to_vmem [thread:$0]  %s1, 256, %s31, [#allocation5], 128, 128, 8
    $region9: #{feed_forward_regressor.1} parent=1 // pred_fallthru
      _
    // Predicated region
    $region10: #{feed_forward_regressor.1} parent=1 // pred_check
      _
    $region11: #{feed_forward_regressor.1} parent=1 // pred_check_branch
      %38 = sbr.rel (0) target = $region13
    $region12: #{feed_forward_regressor.1} parent=1 // pred_region
      _
    $region13: #{feed_forward_regressor.1} parent=1 // pred_fallthru
      _
    // Predicated region
    $region14: #{feed_forward_regressor.1} parent=1 // pred_check
      _
    $region15: #{feed_forward_regressor.1} parent=1 // pred_check_branch
      %40 = sbr.rel (0) target = $region17
    $region16: #{feed_forward_regressor.1} parent=1 // pred_region
      %s42 = ssub.s32 2048, 2048
      %43 = vsyncadd [#allocation5], %s42
      %s44 = sshll.u32 [#allocation6], 4
      %s45 = int_to_ptr.vmem [resolvable:$true] %s44
      %50 = dma.hbm_to_vmem [thread:$0]  %s3, 2048, %s45, [#allocation5], 128, 128, 8
    $region17: #{feed_forward_regressor.1} parent=1 // pred_fallthru
      _
    // Predicated region
    $region18: #{feed_forward_regressor.1} parent=1 // pred_check
      _
    $region19: #{feed_forward_regressor.1} parent=1 // pred_check_branch
      %52 = sbr.rel (0) target = $region21
    $region20: #{feed_forward_regressor.1} parent=1 // pred_region
      _
    $region21: #{feed_forward_regressor.1} parent=1 // pred_fallthru
      _
    // Predicated region
    $region22: #{feed_forward_regressor.1} parent=1 // pred_check
      _
    $region23: #{feed_forward_regressor.1} parent=1 // pred_check_branch
      %54 = sbr.rel (0) target = $region25
    $region24: #{feed_forward_regressor.1} parent=1 // pred_region
      %s56 = ssub.s32 2048, 2048
      %57 = vsyncadd [#allocation8], %s56
      %s58 = sshll.u32 [#allocation7], 4
      %s59 = int_to_ptr.vmem [resolvable:$true] %s58
      %64 = dma.hbm_to_vmem [thread:$0]  %s5, 2048, %s59, [#allocation8], 128, 128, 8
    $region25: #{feed_forward_regressor.1} parent=1 // pred_fallthru
      _
    // Predicated region
    $region26: #{feed_forward_regressor.1} parent=1 // pred_check
      _
    $region27: #{feed_forward_regressor.1} parent=1 // pred_check_branch
      %66 = sbr.rel (0) target = $region29
    $region28: #{feed_forward_regressor.1} parent=1 // pred_region
      _
    $region29: #{feed_forward_regressor.1} parent=1 // pred_fallthru
      _
    // Predicated region
    $region30: #{feed_forward_regressor.1} parent=1 // pred_check
      _
    $region31: #{feed_forward_regressor.1} parent=1 // pred_check_branch
      %68 = sbr.rel (0) target = $region33
    $region32: #{feed_forward_regressor.1} parent=1 // pred_region
      %69 = dma.done [#allocation3], 128
    $region33: #{feed_forward_regressor.1} parent=1 // pred_fallthru
      _
    // Predicated region
    $region34: #{feed_forward_regressor.1} parent=1 // pred_check
      _
    $region35: #{feed_forward_regressor.1} parent=1 // pred_check_branch
      %71 = sbr.rel (0) target = $region37
    $region36: #{feed_forward_regressor.1} parent=1 // pred_region
      %72 = dma.done [#allocation5], 256
    $region37: #{feed_forward_regressor.1} parent=1 // pred_fallthru
      _
    // Predicated region
    $region38: #{feed_forward_regressor.1} parent=1 // pred_check
      _
    $region39: #{feed_forward_regressor.1} parent=1 // pred_check_branch
      %74 = sbr.rel (0) target = $region41
    $region40: #{feed_forward_regressor.1} parent=1 // pred_region
      %75 = dma.done [#allocation5], 2048
    $region41: #{feed_forward_regressor.1} parent=1 // pred_fallthru
      _
    // Predicated region
    $region42: #{feed_forward_regressor.1} parent=1 // pred_check
      _
    $region43: #{feed_forward_regressor.1} parent=1 // pred_check_branch
      %77 = sbr.rel (0) target = $region45
    $region44: #{feed_forward_regressor.1} parent=1 // pred_region
      %78 = dma.done [#allocation8], 2048
    $region45: #{feed_forward_regressor.1} parent=1 // pred_fallthru
      _
    %v79 = vld [vmem:[#allocation2] sm:$0xff]
    %v80 = vld [vmem:[#allocation4] sm:$0xff]
    %v81 = vld [vmem:[#allocation4 + $0x8] sm:$0xff]
    %v82 = vld [vmem:[%s2] sm:$0x1]
    %v84 = vlaneseq
    %v85 = vshrl.u32 %v84, 7
    %v86 = vsub.s32 0, %v85
    %v87 = vrot.slane %v82, %v86
    %vm89 = vcmask 130048
    %v91 = vsel %vm89, %v79, 0
    %93 = vmatprep.subr.mxu0 0.0
    %94 = vmatpush1.msra.mxu0 %v80
    %95 = vmatprep.subr.mxu0 0.0
    %96 = vmatpush1.msra.mxu0 %v81
    %97 = vmatprep.subr.mxu0 0.0
    %98 = vmatpush1.msra.mxu0 0.0
    %99 = vmatprep.subr.mxu0 0.0
    %100 = vmatpush1.msra.mxu0 0.0
    %101 = vmatprep.subr.mxu0 0.0
    %102 = vmatpush1.msra.mxu0 0.0
    %103 = vmatprep.subr.mxu0 0.0
    %104 = vmatpush1.msra.mxu0 0.0
    %105 = vmatprep.subr.mxu0 0.0
    %106 = vmatpush1.msra.mxu0 0.0
    %107 = vmatprep.subr.mxu0 0.0
    %108 = vmatpush1.msra.mxu0 0.0
    %109 = vmatprep.subr.mxu0 0.0
    %110 = vmatpush1.msra.mxu0 0.0
    %111 = vmatprep.subr.mxu0 0.0
    %112 = vmatpush1.msra.mxu0 0.0
    %113 = vmatprep.subr.mxu0 0.0
    %114 = vmatpush1.msra.mxu0 0.0
    %115 = vmatprep.subr.mxu0 0.0
    %116 = vmatpush1.msra.mxu0 0.0
    %117 = vmatprep.subr.mxu0 0.0
    %118 = vmatpush1.msra.mxu0 0.0
    %119 = vmatprep.subr.mxu0 0.0
    %120 = vmatpush1.msra.mxu0 0.0
    %121 = vmatprep.subr.mxu0 0.0
    %122 = vmatpush1.msra.mxu0 0.0
    %123 = vmatprep.subr.mxu0 0.0
    %124 = vmatpush1.msra.mxu0 0.0
    %125 = vmatprep.subr.mxu0 0.0
    %126 = vmatpush1.msra.mxu0 0.0
    %127 = vmatprep.subr.mxu0 0.0
    %128 = vmatpush1.msra.mxu0 0.0
    %129 = vmatprep.subr.mxu0 0.0
    %130 = vmatpush1.msra.mxu0 0.0
    %131 = vmatprep.subr.mxu0 0.0
    %132 = vmatpush1.msra.mxu0 0.0
    %133 = vmatprep.subr.mxu0 0.0
    %134 = vmatpush1.msra.mxu0 0.0
    %135 = vmatprep.subr.mxu0 0.0
    %136 = vmatpush1.msra.mxu0 0.0
    %137 = vmatprep.subr.mxu0 0.0
    %138 = vmatpush1.msra.mxu0 0.0
    %139 = vmatprep.subr.mxu0 0.0
    %140 = vmatpush1.msra.mxu0 0.0
    %141 = vmatprep.subr.mxu0 0.0
    %142 = vmatpush1.msra.mxu0 0.0
    %143 = vmatprep.subr.mxu0 0.0
    %144 = vmatpush1.msra.mxu0 0.0
    %145 = vmatprep.subr.mxu0 0.0
    %146 = vmatpush1.msra.mxu0 0.0
    %147 = vmatprep.subr.mxu0 0.0
    %148 = vmatpush1.msra.mxu0 0.0
    %149 = vmatprep.subr.mxu0 0.0
    %150 = vmatpush1.msra.mxu0 0.0
    %151 = vmatprep.subr.mxu0 0.0
    %152 = vmatpush1.msra.mxu0 0.0
    %153 = vmatprep.subr.mxu0 0.0
    %154 = vmatpush1.msra.mxu0 0.0
    %155 = vmatprep.subr.mxu0 0.0
    %156 = vmatpush1.msra.mxu0 0.0
    %157 = vmatprep.mubr.f32.mxu0 0.0
    %158 = vmatmul.mubr.f32.gmra.mrb[0].mxu0 %v91
    %v159 = vpop.f32.mrb[0].mxu0
    %v160 = vadd.f32 %v87, %v159
    %v161 = vpop.f32.mrb[0].mxu0
    %162 = vdwg.mxu0
    %v163 = vmax.f32 %v160, 0.0
    %v164 = vld [vmem:[#allocation6] sm:$0xff]
    %v165 = vld [vmem:[#allocation6 + $0x8] sm:$0xff]
    %v166 = vld [vmem:[#allocation6 + $0x10] sm:$0xff]
    %v167 = vld [vmem:[#allocation6 + $0x18] sm:$0xff]
    %v168 = vld [vmem:[#allocation6 + $0x20] sm:$0xff]
    %v169 = vld [vmem:[#allocation6 + $0x28] sm:$0xff]
    %v170 = vld [vmem:[#allocation6 + $0x30] sm:$0xff]
    %v171 = vld [vmem:[#allocation6 + $0x38] sm:$0xff]
    %v172 = vld [vmem:[#allocation6 + $0x40] sm:$0xff]
    %v173 = vld [vmem:[#allocation6 + $0x48] sm:$0xff]
    %v174 = vld [vmem:[#allocation6 + $0x50] sm:$0xff]
    %v175 = vld [vmem:[#allocation6 + $0x58] sm:$0xff]
    %v176 = vld [vmem:[#allocation6 + $0x60] sm:$0xff]
    %v177 = vld [vmem:[#allocation6 + $0x68] sm:$0xff]
    %v178 = vld [vmem:[#allocation6 + $0x70] sm:$0xff]
    %v179 = vld [vmem:[#allocation6 + $0x78] sm:$0xff]
    %v180 = vld [vmem:[%s4] sm:$0x1]
    %v182 = vlaneseq
    %v183 = vshrl.u32 %v182, 7
    %v184 = vsub.s32 0, %v183
    %v185 = vrot.slane %v180, %v184
    %187 = vmatprep.subr.mxu0 0.0
    %188 = vmatpush1.msra.mxu0 %v164
    %189 = vmatprep.subr.mxu0 0.0
    %190 = vmatpush1.msra.mxu0 %v165
    %191 = vmatprep.subr.mxu0 0.0
    %192 = vmatpush1.msra.mxu0 %v166
    %193 = vmatprep.subr.mxu0 0.0
    %194 = vmatpush1.msra.mxu0 %v167
    %195 = vmatprep.subr.mxu0 0.0
    %196 = vmatpush1.msra.mxu0 %v168
    %197 = vmatprep.subr.mxu0 0.0
    %198 = vmatpush1.msra.mxu0 %v169
    %199 = vmatprep.subr.mxu0 0.0
    %200 = vmatpush1.msra.mxu0 %v170
    %201 = vmatprep.subr.mxu0 0.0
    %202 = vmatpush1.msra.mxu0 %v171
    %203 = vmatprep.subr.mxu0 0.0
    %204 = vmatpush1.msra.mxu0 %v172
    %205 = vmatprep.subr.mxu0 0.0
    %206 = vmatpush1.msra.mxu0 %v173
    %207 = vmatprep.subr.mxu0 0.0
    %208 = vmatpush1.msra.mxu0 %v174
    %209 = vmatprep.subr.mxu0 0.0
    %210 = vmatpush1.msra.mxu0 %v175
    %211 = vmatprep.subr.mxu0 0.0
    %212 = vmatpush1.msra.mxu0 %v176
    %213 = vmatprep.subr.mxu0 0.0
    %214 = vmatpush1.msra.mxu0 %v177
    %215 = vmatprep.subr.mxu0 0.0
    %216 = vmatpush1.msra.mxu0 %v178
    %217 = vmatprep.subr.mxu0 0.0
    %218 = vmatpush1.msra.mxu0 %v179
    %219 = vmatprep.subr.mxu0 0.0
    %220 = vmatpush1.msra.mxu0 0.0
    %221 = vmatprep.subr.mxu0 0.0
    %222 = vmatpush1.msra.mxu0 0.0
    %223 = vmatprep.subr.mxu0 0.0
    %224 = vmatpush1.msra.mxu0 0.0
    %225 = vmatprep.subr.mxu0 0.0
    %226 = vmatpush1.msra.mxu0 0.0
    %227 = vmatprep.subr.mxu0 0.0
    %228 = vmatpush1.msra.mxu0 0.0
    %229 = vmatprep.subr.mxu0 0.0
    %230 = vmatpush1.msra.mxu0 0.0
    %231 = vmatprep.subr.mxu0 0.0
    %232 = vmatpush1.msra.mxu0 0.0
    %233 = vmatprep.subr.mxu0 0.0
    %234 = vmatpush1.msra.mxu0 0.0
    %235 = vmatprep.subr.mxu0 0.0
    %236 = vmatpush1.msra.mxu0 0.0
    %237 = vmatprep.subr.mxu0 0.0
    %238 = vmatpush1.msra.mxu0 0.0
    %239 = vmatprep.subr.mxu0 0.0
    %240 = vmatpush1.msra.mxu0 0.0
    %241 = vmatprep.subr.mxu0 0.0
    %242 = vmatpush1.msra.mxu0 0.0
    %243 = vmatprep.subr.mxu0 0.0
    %244 = vmatpush1.msra.mxu0 0.0
    %245 = vmatprep.subr.mxu0 0.0
    %246 = vmatpush1.msra.mxu0 0.0
    %247 = vmatprep.subr.mxu0 0.0
    %248 = vmatpush1.msra.mxu0 0.0
    %249 = vmatprep.subr.mxu0 0.0
    %250 = vmatpush1.msra.mxu0 0.0
    %251 = vmatprep.mubr.f32.mxu0 0.0
    %252 = vmatmul.mubr.f32.gmra.mrb[0].mxu0 %v163
    %v253 = vpop.f32.mrb[0].mxu0
    %v254 = vadd.f32 %v185, %v253
    %v255 = vpop.f32.mrb[0].mxu0
    %256 = vdwg.mxu0
    %v257 = vmax.f32 %v254, 0.0
    %v258 = vld [vmem:[#allocation7] sm:$0xff]
    %v259 = vld [vmem:[#allocation7 + $0x8] sm:$0xff]
    %v260 = vld [vmem:[#allocation7 + $0x10] sm:$0xff]
    %v261 = vld [vmem:[#allocation7 + $0x18] sm:$0xff]
    %v262 = vld [vmem:[#allocation7 + $0x20] sm:$0xff]
    %v263 = vld [vmem:[#allocation7 + $0x28] sm:$0xff]
    %v264 = vld [vmem:[#allocation7 + $0x30] sm:$0xff]
    %v265 = vld [vmem:[#allocation7 + $0x38] sm:$0xff]
    %v266 = vld [vmem:[#allocation7 + $0x40] sm:$0xff]
    %v267 = vld [vmem:[#allocation7 + $0x48] sm:$0xff]
    %v268 = vld [vmem:[#allocation7 + $0x50] sm:$0xff]
    %v269 = vld [vmem:[#allocation7 + $0x58] sm:$0xff]
    %v270 = vld [vmem:[#allocation7 + $0x60] sm:$0xff]
    %v271 = vld [vmem:[#allocation7 + $0x68] sm:$0xff]
    %v272 = vld [vmem:[#allocation7 + $0x70] sm:$0xff]
    %v273 = vld [vmem:[#allocation7 + $0x78] sm:$0xff]
    %v274 = vld [vmem:[%s6] sm:$0x1]
    %v276 = vlaneseq
    %v277 = vshrl.u32 %v276, 7
    %v278 = vsub.s32 0, %v277
    %v279 = vrot.slane %v274, %v278
    %281 = vmatprep.subr.mxu0 0.0
    %282 = vmatpush1.msra.mxu0 %v258
    %283 = vmatprep.subr.mxu0 0.0
    %284 = vmatpush1.msra.mxu0 %v259
    %285 = vmatprep.subr.mxu0 0.0
    %286 = vmatpush1.msra.mxu0 %v260
    %287 = vmatprep.subr.mxu0 0.0
    %288 = vmatpush1.msra.mxu0 %v261
    %289 = vmatprep.subr.mxu0 0.0
    %290 = vmatpush1.msra.mxu0 %v262
    %291 = vmatprep.subr.mxu0 0.0
    %292 = vmatpush1.msra.mxu0 %v263
    %293 = vmatprep.subr.mxu0 0.0
    %294 = vmatpush1.msra.mxu0 %v264
    %295 = vmatprep.subr.mxu0 0.0
    %296 = vmatpush1.msra.mxu0 %v265
    %297 = vmatprep.subr.mxu0 0.0
    %298 = vmatpush1.msra.mxu0 %v266
    %299 = vmatprep.subr.mxu0 0.0
    %300 = vmatpush1.msra.mxu0 %v267
    %301 = vmatprep.subr.mxu0 0.0
    %302 = vmatpush1.msra.mxu0 %v268
    %303 = vmatprep.subr.mxu0 0.0
    %304 = vmatpush1.msra.mxu0 %v269
    %305 = vmatprep.subr.mxu0 0.0
    %306 = vmatpush1.msra.mxu0 %v270
    %307 = vmatprep.subr.mxu0 0.0
    %308 = vmatpush1.msra.mxu0 %v271
    %309 = vmatprep.subr.mxu0 0.0
    %310 = vmatpush1.msra.mxu0 %v272
    %311 = vmatprep.subr.mxu0 0.0
    %312 = vmatpush1.msra.mxu0 %v273
    %313 = vmatprep.subr.mxu0 0.0
    %314 = vmatpush1.msra.mxu0 0.0
    %315 = vmatprep.subr.mxu0 0.0
    %316 = vmatpush1.msra.mxu0 0.0
    %317 = vmatprep.subr.mxu0 0.0
    %318 = vmatpush1.msra.mxu0 0.0
    %319 = vmatprep.subr.mxu0 0.0
    %320 = vmatpush1.msra.mxu0 0.0
    %321 = vmatprep.subr.mxu0 0.0
    %322 = vmatpush1.msra.mxu0 0.0
    %323 = vmatprep.subr.mxu0 0.0
    %324 = vmatpush1.msra.mxu0 0.0
    %325 = vmatprep.subr.mxu0 0.0
    %326 = vmatpush1.msra.mxu0 0.0
    %327 = vmatprep.subr.mxu0 0.0
    %328 = vmatpush1.msra.mxu0 0.0
    %329 = vmatprep.subr.mxu0 0.0
    %330 = vmatpush1.msra.mxu0 0.0
    %331 = vmatprep.subr.mxu0 0.0
    %332 = vmatpush1.msra.mxu0 0.0
    %333 = vmatprep.subr.mxu0 0.0
    %334 = vmatpush1.msra.mxu0 0.0
    %335 = vmatprep.subr.mxu0 0.0
    %336 = vmatpush1.msra.mxu0 0.0
    %337 = vmatprep.subr.mxu0 0.0
    %338 = vmatpush1.msra.mxu0 0.0
    %339 = vmatprep.subr.mxu0 0.0
    %340 = vmatpush1.msra.mxu0 0.0
    %341 = vmatprep.subr.mxu0 0.0
    %342 = vmatpush1.msra.mxu0 0.0
    %343 = vmatprep.subr.mxu0 0.0
    %344 = vmatpush1.msra.mxu0 0.0
    %345 = vmatprep.mubr.f32.mxu0 0.0
    %346 = vmatmul.mubr.f32.gmra.mrb[0].mxu0 %v257
    %v347 = vpop.f32.mrb[0].mxu0
    %v348 = vadd.f32 %v279, %v347
    %v349 = vpop.f32.mrb[0].mxu0
    %350 = vdwg.mxu0
    %vm351 = vcmask 7168
    %352 = vst.msk [vmem:[%s7] sm:$0xff] %vm351, %v348
    // Predicated region
    $region46: #{feed_forward_regressor.1} parent=1 // pred_check
      _
    $region47: #{feed_forward_regressor.1} parent=1 // pred_check_branch
      %354 = sbr.rel (0) target = $region49
    $region48: #{feed_forward_regressor.1} parent=1 // pred_region
      _
    $region49: #{feed_forward_regressor.1} parent=1 // pred_fallthru
      _
    // Predicated region
    $region50: #{feed_forward_regressor.1} parent=1 // pred_check
      _
    $region51: #{feed_forward_regressor.1} parent=1 // pred_check_branch
      %356 = sbr.rel (0) target = $region53
    $region52: #{feed_forward_regressor.1} parent=1 // pred_region
      _
    $region53: #{feed_forward_regressor.1} parent=1 // pred_fallthru
      _
    %357 = vsyncpa [#allocation3], 1
    %358 = vsyncpa [#allocation5], 1
    %359 = vsyncpa [#allocation8], 1

</llo_original>
